<compile_context>
chip_gen: v5e
topology: v5e:2x2
jax: 0.10.0
libtpu: 0.0.40
codegen_flags: <defaults>
</compile_context>

<pallas_src>
import jax
import jax.numpy as jnp
from jax.experimental import pallas as pl
from jax.experimental.pallas import tpu as pltpu


def _round_up(x, m):
    return ((x + m - 1) // m) * m


def _choose_tiling(B, *, cap=8192, min_steps_hint=2):
    """Pick (batch_tile, B_pad) for a batch of size B.

    - B_pad is a multiple of 128 (lane width); padding beyond that is only
      accepted (bounded to <= 1/8 extra work) when the 128-chunk count has no
      usable divisor, e.g. a prime number of chunks.
    - batch_tile divides B_pad and is <= cap.
    - When possible the grid has >= min_steps_hint steps so the 'parallel'
      batch axis can shard across v7x's two TensorCores.
    """
    B128 = _round_up(max(int(B), 1), 128)
    n = B128 // 128                      # number of 128-row chunks
    cap_chunks = max(1, cap // 128)

    divisors = [d for d in range(1, min(n, cap_chunks) + 1) if n % d == 0]
    multi = [d for d in divisors if n // d >= min_steps_hint]
    d_exact = max(multi) if multi else max(divisors)

    d = d_exact
    # Awkward n (e.g. prime): the exact-divisor tile would be tiny and the
    # kernel would go back to being step-overhead bound.  Accept a larger
    # tile with bounded padding waste (<= 12.5% extra rows).
    if d_exact * 8 < min(n, cap_chunks):
        d_pad = min(n, cap_chunks)
        while d_pad > d_exact and (_round_up(n, d_pad) - n) * 8 > n:
            d_pad -= 1
        d = max(d_exact, d_pad)

    batch_tile = d * 128
    B_pad = _round_up(B128, batch_tile)
    return batch_tile, B_pad


def agent_net_kernel(xT_ref, w1_ref, b1_ref, w2_ref, b2_ref, w3_ref, b3_ref,
                     outT_ref):
    """Transposed-activation forward for one batch tile.

    xT_ref   : (n_obs, TB)   compute dtype (bf16 default, or f32)
    w*_ref   : (out, in)     compute dtype (PyTorch weight layout)
    b*_ref   : (out, 1)      f32
    outT_ref : (n_act, TB)   out dtype (f32 default)
    """
    cdt = w1_ref.dtype
    xT = xT_ref[...]                                          # (n_obs, TB)

    # l1: Linear + Tanh -> (H, TB); MXU with f32 accumulation.
    h1 = jnp.tanh(
        jnp.dot(w1_ref[...], xT, preferred_element_type=jnp.float32)
        + b1_ref[...])

    # l2: Linear + Tanh with residual (x = x + l2(x)); tanh/residual in f32.
    h2 = h1 + jnp.tanh(
        jnp.dot(w2_ref[...], h1.astype(cdt),
                preferred_element_type=jnp.float32)
        + b2_ref[...])

    # l3: Linear (no activation) -> (n_act, TB); lane-dense store.
    aT = (jnp.dot(w3_ref[...], h2.astype(cdt),
                  preferred_element_type=jnp.float32)
          + b3_ref[...])

    outT_ref[...] = aT.astype(outT_ref.dtype)


def agent_net_forward(x, params, *,
                      compute_dtype=jnp.bfloat16,
                      out_dtype=jnp.float32,
                      batch_tile=None,
                      x_is_feature_major=False,
                      return_feature_major=False):
    """Agent_net forward.

    x: (B, n_obs) f32 by default; pass x_is_feature_major=True to supply
       (n_obs, B) directly and skip the wrapper transpose.
    params: dict of w1,b1,w2,b2,w3,b3 in PyTorch layout (W:(out,in), b:(out,1)).
    compute_dtype: MXU-input dtype (bf16 default; f32 for bitwise-tight output).
    """
    if x_is_feature_major:
        n_obs, B = x.shape
        xT = x
    else:
        B, n_obs = x.shape
        xT = x.T
    H = params["w1"].shape[0]
    n_act = params["w3"].shape[0]

    if batch_tile is None:
        batch_tile, B_pad = _choose_tiling(B)
    else:
        batch_tile = _round_up(batch_tile, 128)
        B_pad = _round_up(max(B, 1), batch_tile)
    grid = (B_pad // batch_tile,)

    # Single fused pad-of-transpose (no zeros+scatter); batch stays the minor
    # (lane) dim so x loads and output stores are unmasked 128-lane accesses.
    xT = xT.astype(compute_dtype)
    if B_pad != B:
        xT = jnp.pad(xT, ((0, 0), (0, B_pad - B)))

    w1 = params["w1"].astype(compute_dtype)
    w2 = params["w2"].astype(compute_dtype)
    w3 = params["w3"].astype(compute_dtype)
    b1 = params["b1"].astype(jnp.float32)
    b2 = params["b2"].astype(jnp.float32)
    b3 = params["b3"].astype(jnp.float32)

    # Weights/biases: full-array blocks, constant index_map -> VMEM-resident.
    const_spec = lambda a: pl.BlockSpec(a.shape, lambda i: (0, 0))

    flops = 2 * B_pad * (n_obs * H + H * H + H * n_act)
    bytes_accessed = (
        xT.size * xT.dtype.itemsize
        + sum(a.size * a.dtype.itemsize for a in (w1, b1, w2, b2, w3, b3))
        + n_act * B_pad * jnp.dtype(out_dtype).itemsize)

    outT = pl.pallas_call(
        agent_net_kernel,
        grid=grid,
        in_specs=[
            pl.BlockSpec((n_obs, batch_tile), lambda i: (0, i)),
            const_spec(w1), const_spec(b1),
            const_spec(w2), const_spec(b2),
            const_spec(w3), const_spec(b3),
        ],
        out_specs=pl.BlockSpec((n_act, batch_tile), lambda i: (0, i)),
        out_shape=jax.ShapeDtypeStruct((n_act, B_pad), out_dtype),
        compiler_params=pltpu.CompilerParams(
            dimension_semantics=("parallel",),
            vmem_limit_bytes=32 * 1024 * 1024),
        cost_estimate=pl.CostEstimate(
            flops=flops,
            transcendentals=2 * B_pad * H,
            bytes_accessed=bytes_accessed),
    )(xT, w1, b1, w2, b2, w3, b3)

    outT = outT[:, :B]
    if return_feature_major:
        return outT                     # (n_act, B), no wrapper transpose
    return outT.T                       # (B, n_act), PyTorch-compatible


def init_params(key, n_obs, n_act, hidden_dim):
    """PyTorch nn.Linear-style init: W (out, in), b (out, 1), U(-1/sqrt(fan_in), +)."""
    def linear(key, fan_in, fan_out):
        kw, kb = jax.random.split(key)
        bound = 1.0 / jnp.sqrt(fan_in)
        w = jax.random.uniform(kw, (fan_out, fan_in), jnp.float32, -bound, bound)
        b = jax.random.uniform(kb, (fan_out, 1), jnp.float32, -bound, bound)
        return w, b

    k1, k2, k3 = jax.random.split(key, 3)
    w1, b1 = linear(k1, n_obs, hidden_dim)
    w2, b2 = linear(k2, hidden_dim, hidden_dim)
    w3, b3 = linear(k3, hidden_dim, n_act)
    return dict(w1=w1, b1=b1, w2=w2, b2=b2, w3=w3, b3=b3)


def reference_forward(x, p):
    h1 = jnp.tanh(x @ p["w1"].T + p["b1"][:, 0])
    h2 = h1 + jnp.tanh(h1 @ p["w2"].T + p["b2"][:, 0])
    return h2 @ p["w3"].T + p["b3"][:, 0]


if __name__ == "__main__":
    B, n_obs, n_act, hidden_dim = 8, 16, 4, 32

    key = jax.random.PRNGKey(0)
    kx, kp = jax.random.split(key)
    x = jax.random.normal(kx, (B, n_obs), jnp.float32)
    params = init_params(kp, n_obs, n_act, hidden_dim)

    ref = reference_forward(x, params)

    # f32 MXU path: matches the JAX reference tightly.
    out_f32 = jax.block_until_ready(
        agent_net_forward(x, params, compute_dtype=jnp.float32))
    assert out_f32.shape == (B, n_act)
    assert jnp.allclose(out_f32, ref, atol=1e-4, rtol=1e-4), \
        "f32 mismatch vs JAX reference"

    # Default (bf16 MXU-input) path: only input/weight rounding error remains
    # (accumulation, bias, tanh and residual stay f32), so tolerance is loose.
    out_bf16 = jax.block_until_ready(agent_net_forward(x, params))
    assert out_bf16.shape == (B, n_act)
    assert jnp.allclose(out_bf16, ref, atol=1e-1, rtol=1e-1), \
        "bf16 mismatch vs JAX reference"

    # Feature-major in/out path (skips wrapper transposes) must agree too.
    out_fm = jax.block_until_ready(
        agent_net_forward(x.T, params, compute_dtype=jnp.float32,
                          x_is_feature_major=True, return_feature_major=True))
    assert out_fm.shape == (n_act, B)
    assert jnp.allclose(out_fm.T, ref, atol=1e-4, rtol=1e-4), \
        "feature-major mismatch vs JAX reference"

    # Larger, awkward batch to exercise the tiling chooser (padding + >=2 steps).
    B2 = 1100
    x2 = jax.random.normal(jax.random.PRNGKey(1), (B2, n_obs), jnp.float32)
    ref2 = reference_forward(x2, params)
    out2 = jax.block_until_ready(
        agent_net_forward(x2, params, compute_dtype=jnp.float32))
    assert out2.shape == (B2, n_act)
    assert jnp.allclose(out2, ref2, atol=1e-4, rtol=1e-4), \
        "large-batch mismatch vs JAX reference"

    print("KERNEL_OK")
</pallas_src>

<mosaic_0001>
module attributes {stable_mosaic.version = 11 : i64} {
  func.func @agent_net_kernel(%arg0: i32, %arg1: memref<16x128xf32, #tpu.memory_space<vmem>>, %arg2: memref<32x16xf32, #tpu.memory_space<vmem>>, %arg3: memref<32x1xf32, #tpu.memory_space<vmem>>, %arg4: memref<32x32xf32, #tpu.memory_space<vmem>>, %arg5: memref<32x1xf32, #tpu.memory_space<vmem>>, %arg6: memref<4x32xf32, #tpu.memory_space<vmem>>, %arg7: memref<4x1xf32, #tpu.memory_space<vmem>>, %arg8: memref<4x128xf32, #tpu.memory_space<vmem>>) attributes {dimension_semantics = [#tpu.dimension_semantics<parallel>], iteration_bounds = array<i64: 1>, scalar_prefetch = 0 : i64, scratch_operands = 0 : i64, tpu.core_type = #tpu.core_type<tc>, window_params = [{transform_indices = @transform_0, window_bounds = array<i64: 16, 128>}, {pipeline_mode = #tpu.pipeline_mode<synchronous>, transform_indices = @transform_1, window_bounds = array<i64: 32, 16>}, {pipeline_mode = #tpu.pipeline_mode<synchronous>, transform_indices = @transform_2, window_bounds = array<i64: 32, 1>}, {pipeline_mode = #tpu.pipeline_mode<synchronous>, transform_indices = @transform_3, window_bounds = array<i64: 32, 32>}, {pipeline_mode = #tpu.pipeline_mode<synchronous>, transform_indices = @transform_4, window_bounds = array<i64: 32, 1>}, {pipeline_mode = #tpu.pipeline_mode<synchronous>, transform_indices = @transform_5, window_bounds = array<i64: 4, 32>}, {pipeline_mode = #tpu.pipeline_mode<synchronous>, transform_indices = @transform_6, window_bounds = array<i64: 4, 1>}, {transform_indices = @transform_7, window_bounds = array<i64: 4, 128>}]} {
    %c0 = arith.constant 0 : index
    %c0_0 = arith.constant 0 : index
    %0 = vector.load %arg1[%c0, %c0_0] : memref<16x128xf32, #tpu.memory_space<vmem>>, vector<16x128xf32>
    %c0_1 = arith.constant 0 : index
    %c0_2 = arith.constant 0 : index
    %1 = vector.load %arg2[%c0_1, %c0_2] : memref<32x16xf32, #tpu.memory_space<vmem>>, vector<32x16xf32>
    %cst = arith.constant dense<0.000000e+00> : vector<32x128xf32>
    %2 = tpu.matmul %1, %0, %cst {dimension_numbers = #tpu.dot_dimension_numbers<[1], [0], [0], [1], [0, 0, 1, 1], [], []>} : vector<32x16xf32>, vector<16x128xf32>, vector<32x128xf32> -> vector<32x128xf32>
    %c0_3 = arith.constant 0 : index
    %c0_4 = arith.constant 0 : index
    %3 = vector.load %arg3[%c0_3, %c0_4] : memref<32x1xf32, #tpu.memory_space<vmem>>, vector<32x1xf32>
    %4 = vector.broadcast %3 : vector<32x1xf32> to vector<32x128xf32>
    %5 = arith.addf %2, %4 : vector<32x128xf32>
    %6 = math.tanh %5 : vector<32x128xf32>
    %c0_5 = arith.constant 0 : index
    %c0_6 = arith.constant 0 : index
    %7 = vector.load %arg4[%c0_5, %c0_6] : memref<32x32xf32, #tpu.memory_space<vmem>>, vector<32x32xf32>
    %cst_7 = arith.constant dense<0.000000e+00> : vector<32x128xf32>
    %8 = tpu.matmul %7, %6, %cst_7 {dimension_numbers = #tpu.dot_dimension_numbers<[1], [0], [0], [1], [0, 0, 1, 1], [], []>} : vector<32x32xf32>, vector<32x128xf32>, vector<32x128xf32> -> vector<32x128xf32>
    %c0_8 = arith.constant 0 : index
    %c0_9 = arith.constant 0 : index
    %9 = vector.load %arg5[%c0_8, %c0_9] : memref<32x1xf32, #tpu.memory_space<vmem>>, vector<32x1xf32>
    %10 = vector.broadcast %9 : vector<32x1xf32> to vector<32x128xf32>
    %11 = arith.addf %8, %10 : vector<32x128xf32>
    %12 = math.tanh %11 : vector<32x128xf32>
    %13 = arith.addf %6, %12 : vector<32x128xf32>
    %c0_10 = arith.constant 0 : index
    %c0_11 = arith.constant 0 : index
    %14 = vector.load %arg6[%c0_10, %c0_11] : memref<4x32xf32, #tpu.memory_space<vmem>>, vector<4x32xf32>
    %cst_12 = arith.constant dense<0.000000e+00> : vector<4x128xf32>
    %15 = tpu.matmul %14, %13, %cst_12 {dimension_numbers = #tpu.dot_dimension_numbers<[1], [0], [0], [1], [0, 0, 1, 1], [], []>} : vector<4x32xf32>, vector<32x128xf32>, vector<4x128xf32> -> vector<4x128xf32>
    %c0_13 = arith.constant 0 : index
    %c0_14 = arith.constant 0 : index
    %16 = vector.load %arg7[%c0_13, %c0_14] : memref<4x1xf32, #tpu.memory_space<vmem>>, vector<4x1xf32>
    %17 = vector.broadcast %16 : vector<4x1xf32> to vector<4x128xf32>
    %18 = arith.addf %15, %17 : vector<4x128xf32>
    %c0_15 = arith.constant 0 : index
    %c0_16 = arith.constant 0 : index
    %19 = vector.load %arg8[%c0_15, %c0_16] : memref<4x128xf32, #tpu.memory_space<vmem>>, vector<4x128xf32>
    tpu.vector_store %arg8[%c0_15, %c0_16], %18 {strides = array<i32>} : memref<4x128xf32, #tpu.memory_space<vmem>>, vector<4x128xf32>,
    return
  }
  func.func @transform_0(%arg0: i32) -> (i32, i32) {
    %c0_i32 = arith.constant 0 : i32
    %c0_i32_0 = arith.constant 0 : i32
    return %c0_i32, %arg0 : i32, i32
  }
  func.func @transform_1(%arg0: i32) -> (i32, i32) {
    %c0_i32 = arith.constant 0 : i32
    %c0_i32_0 = arith.constant 0 : i32
    %c0_i32_1 = arith.constant 0 : i32
    return %c0_i32, %c0_i32_0 : i32, i32
  }
  func.func @transform_2(%arg0: i32) -> (i32, i32) {
    %c0_i32 = arith.constant 0 : i32
    %c0_i32_0 = arith.constant 0 : i32
    %c0_i32_1 = arith.constant 0 : i32
    return %c0_i32, %c0_i32_0 : i32, i32
  }
  func.func @transform_3(%arg0: i32) -> (i32, i32) {
    %c0_i32 = arith.constant 0 : i32
    %c0_i32_0 = arith.constant 0 : i32
    %c0_i32_1 = arith.constant 0 : i32
    return %c0_i32, %c0_i32_0 : i32, i32
  }
  func.func @transform_4(%arg0: i32) -> (i32, i32) {
    %c0_i32 = arith.constant 0 : i32
    %c0_i32_0 = arith.constant 0 : i32
    %c0_i32_1 = arith.constant 0 : i32
    return %c0_i32, %c0_i32_0 : i32, i32
  }
  func.func @transform_5(%arg0: i32) -> (i32, i32) {
    %c0_i32 = arith.constant 0 : i32
    %c0_i32_0 = arith.constant 0 : i32
    %c0_i32_1 = arith.constant 0 : i32
    return %c0_i32, %c0_i32_0 : i32, i32
  }
  func.func @transform_6(%arg0: i32) -> (i32, i32) {
    %c0_i32 = arith.constant 0 : i32
    %c0_i32_0 = arith.constant 0 : i32
    %c0_i32_1 = arith.constant 0 : i32
    return %c0_i32, %c0_i32_0 : i32, i32
  }
  func.func @transform_7(%arg0: i32) -> (i32, i32) {
    %c0_i32 = arith.constant 0 : i32
    %c0_i32_0 = arith.constant 0 : i32
    return %c0_i32, %arg0 : i32, i32
  }
}

</mosaic_0001>

<llo_original>
// kernel: tpu_custom_call.1
$region0: #{tpu_custom_call.1}
  #allocation0 [shape = 'u32[]', space=smem, size = 0x4, offset = 0x4, fixed_abs, tag = 'smem constant byte address 0x4 - core index']
  #allocation1 [shape = 'u32[72,128]{1,0:T(1,128)}', space=vmem, size = 0x9000, scoped, tag = 'internal scratch']
  %s0 = inlined_call_operand.vmem [shape: f32[16,128], index: 0, kind: input, shape index: {}]
  %s1 = inlined_call_operand.vmem [shape: f32[32,16], index: 1, kind: input, shape index: {}]
  %s2 = inlined_call_operand.vmem [shape: f32[32,1], index: 2, kind: input, shape index: {}]
  %s3 = inlined_call_operand.vmem [shape: f32[32,32], index: 3, kind: input, shape index: {}]
  %s4 = inlined_call_operand.vmem [shape: f32[32,1], index: 4, kind: input, shape index: {}]
  %s5 = inlined_call_operand.vmem [shape: f32[4,32], index: 5, kind: input, shape index: {}]
  %s6 = inlined_call_operand.vmem [shape: f32[4,1], index: 6, kind: input, shape index: {}]
  %s7 = inlined_call_operand.hbm [shape: f32[4,128], index: 7, kind: output, shape index: {}]
  %s8 = sld [smem:[#allocation0]]
  $region38: #{tpu_custom_call.1} parent=0
    _
  %s10 = ssub.s32 1, %s8
  %s11 = scalar_select 0, %s10, %s8
  $region1: #{tpu_custom_call.1} parent=0
    #allocation2 [shape = 'u8[2048]{0}', space=vmem, size = 0x800, scoped, tag = 'output window, operand 0, single buffered']
    #allocation3 [shape = 's32[1]{0}', space=sflag, size = 0x4, scoped, tag = 'scoped memory for tpu_custom_call.1']
    %12 = vsyncpa [#allocation3], 0
    // Predicated region
    $region2: #{tpu_custom_call.1} parent=1 // pred_check
      _
    $region3: #{tpu_custom_call.1} parent=1 // pred_check_branch
      %14 = sbr.rel (0) target = $region5
    $region4: #{tpu_custom_call.1} parent=1 // pred_region
      _
    $region5: #{tpu_custom_call.1} parent=1 // pred_fallthru
      _
    // Predicated region
    $region6: #{tpu_custom_call.1} parent=1 // pred_check
      _
    $region7: #{tpu_custom_call.1} parent=1 // pred_check_branch
      %16 = sbr.rel (0) target = $region9
    $region8: #{tpu_custom_call.1} parent=1 // pred_region
      _
    $region9: #{tpu_custom_call.1} parent=1 // pred_fallthru
      _
    // Predicated region
    $region10: #{tpu_custom_call.1} parent=1 // pred_check
      _
    $region11: #{tpu_custom_call.1} parent=1 // pred_check_branch
      %18 = sbr.rel (0) target = $region13
    $region12: #{tpu_custom_call.1} parent=1 // pred_region
      _
    $region13: #{tpu_custom_call.1} parent=1 // pred_fallthru
      _
    // Predicated region
    $region14: #{tpu_custom_call.1} parent=1 // pred_check
      _
    $region15: #{tpu_custom_call.1} parent=1 // pred_check_branch
      %20 = sbr.rel (0) target = $region17
    $region16: #{tpu_custom_call.1} parent=1 // pred_region
      _
    $region17: #{tpu_custom_call.1} parent=1 // pred_fallthru
      _
    // Predicated region
    $region18: #{tpu_custom_call.1} parent=1 // pred_check
      _
    $region19: #{tpu_custom_call.1} parent=1 // pred_check_branch
      %22 = sbr.rel (0) target = $region21
    $region20: #{tpu_custom_call.1} parent=1 // pred_region
      _
    $region21: #{tpu_custom_call.1} parent=1 // pred_fallthru
      _
    // Predicated region
    $region22: #{tpu_custom_call.1} parent=1 // pred_check
      _
    $region23: #{tpu_custom_call.1} parent=1 // pred_check_branch
      %24 = sbr.rel (0) target = $region25
    $region24: #{tpu_custom_call.1} parent=1 // pred_region
      _
    $region25: #{tpu_custom_call.1} parent=1 // pred_fallthru
      _
    // Predicated region
    $region26: #{tpu_custom_call.1} parent=1 // pred_check
      _
    $region27: #{tpu_custom_call.1} parent=1 // pred_check_branch
      %26 = sbr.rel (0) target = $region29
    $region28: #{tpu_custom_call.1} parent=1 // pred_region
      _
    $region29: #{tpu_custom_call.1} parent=1 // pred_fallthru
      _
    %v27 = vld [vmem:[%s0] sm:$0xff]
    %v28 = vld [vmem:[%s0 + $0x8] sm:$0xff]
    %v29 = vld [vmem:[%s1] sm:$0xff]
    %v30 = vld [vmem:[%s1 + $0x8] sm:$0xff]
    %v31 = vld [vmem:[%s1 + $0x10] sm:$0xff]
    %v32 = vld [vmem:[%s1 + $0x18] sm:$0xff]
    %v33 = vld [vmem:[%s2] sm:$0xff]
    %v34 = vld [vmem:[%s2 + $0x8] sm:$0xff]
    %v35 = vld [vmem:[%s2 + $0x10] sm:$0xff]
    %v36 = vld [vmem:[%s2 + $0x18] sm:$0xff]
    %38 = vset.pattern.permute.xlu0 0
    %39 = vperm.xlu0 %38, %v33
    %v40 = vpop.permute.xlu0 %39
    %43 = vset.pattern.permute.xlu0 0
    %44 = vperm.xlu0 %43, %v34
    %v45 = vpop.permute.xlu0 %44
    %48 = vset.pattern.permute.xlu0 0
    %49 = vperm.xlu0 %48, %v35
    %v50 = vpop.permute.xlu0 %49
    %53 = vset.pattern.permute.xlu0 0
    %54 = vperm.xlu0 %53, %v36
    %v55 = vpop.permute.xlu0 %54
    %vm57 = vcmask 130048
    %v59 = vsel %vm57, %v29, 0
    %v62 = vsel %vm57, %v30, 0
    %v65 = vsel %vm57, %v31, 0
    %v68 = vsel %vm57, %v32, 0
    %70 = vmatpush.msra.mxu0 0.0
    %71 = vmatpush.msra.mxu0 0.0
    %72 = vmatpush.msra.mxu0 0.0
    %73 = vmatpush.msra.mxu0 0.0
    %74 = vmatpush.msra.mxu0 0.0
    %75 = vmatpush.msra.mxu0 0.0
    %76 = vmatpush.msra.mxu0 0.0
    %77 = vmatpush.msra.mxu0 0.0
    %78 = vmatpush.msra.mxu0 0.0
    %79 = vmatpush.msra.mxu0 0.0
    %80 = vmatpush.msra.mxu0 0.0
    %81 = vmatpush.msra.mxu0 0.0
    %82 = vmatpush.msra.mxu0 0.0
    %83 = vmatpush.msra.mxu0 0.0
    %84 = vmatpush.msra.mxu0 %v28
    %85 = vmatpush.msra.mxu0 %v27
    %86 = vmatmul.f32.gmra.mxu0 %v59
    %v87 = vpop.f32.mrf.mxu0
    %v88 = vadd.f32 %v40, %v87
    %89 = vmatmul.f32.gmra.mxu0 %v62
    %v90 = vpop.f32.mrf.mxu0
    %v91 = vadd.f32 %v45, %v90
    %92 = vmatmul.f32.gmra.mxu0 %v65
    %v93 = vpop.f32.mrf.mxu0
    %v94 = vadd.f32 %v50, %v93
    %95 = vmatmul.f32.gmra.mxu0 %v68
    %v96 = vpop.f32.mrf.mxu0
    %v97 = vadd.f32 %v55, %v96
    %98 = vdwg.mxu0
    %v99 = vtanh.pop %v88
    %v100 = vtanh.pop %v91
    %v101 = vtanh.pop %v94
    %v102 = vtanh.pop %v97
    %v103 = vld [vmem:[%s3] sm:$0xff]
    %v104 = vld [vmem:[%s3 + $0x8] sm:$0xff]
    %v105 = vld [vmem:[%s3 + $0x10] sm:$0xff]
    %v106 = vld [vmem:[%s3 + $0x18] sm:$0xff]
    %v107 = vld [vmem:[%s4] sm:$0xff]
    %v108 = vld [vmem:[%s4 + $0x8] sm:$0xff]
    %v109 = vld [vmem:[%s4 + $0x10] sm:$0xff]
    %v110 = vld [vmem:[%s4 + $0x18] sm:$0xff]
    %112 = vset.pattern.permute.xlu0 0
    %113 = vperm.xlu0 %112, %v107
    %v114 = vpop.permute.xlu0 %113
    %117 = vset.pattern.permute.xlu0 0
    %118 = vperm.xlu0 %117, %v108
    %v119 = vpop.permute.xlu0 %118
    %122 = vset.pattern.permute.xlu0 0
    %123 = vperm.xlu0 %122, %v109
    %v124 = vpop.permute.xlu0 %123
    %127 = vset.pattern.permute.xlu0 0
    %128 = vperm.xlu0 %127, %v110
    %v129 = vpop.permute.xlu0 %128
    %vm131 = vcmask 261120
    %v133 = vsel %vm131, %v103, 0
    %v136 = vsel %vm131, %v104, 0
    %v139 = vsel %vm131, %v105, 0
    %v142 = vsel %vm131, %v106, 0
    %144 = vmatpush.msra.mxu0 0.0
    %145 = vmatpush.msra.mxu0 0.0
    %146 = vmatpush.msra.mxu0 0.0
    %147 = vmatpush.msra.mxu0 0.0
    %148 = vmatpush.msra.mxu0 0.0
    %149 = vmatpush.msra.mxu0 0.0
    %150 = vmatpush.msra.mxu0 0.0
    %151 = vmatpush.msra.mxu0 0.0
    %152 = vmatpush.msra.mxu0 0.0
    %153 = vmatpush.msra.mxu0 0.0
    %154 = vmatpush.msra.mxu0 0.0
    %155 = vmatpush.msra.mxu0 0.0
    %156 = vmatpush.msra.mxu0 %v102
    %157 = vmatpush.msra.mxu0 %v101
    %158 = vmatpush.msra.mxu0 %v100
    %159 = vmatpush.msra.mxu0 %v99
    %160 = vmatmul.f32.gmra.mxu0 %v133
    %v161 = vpop.f32.mrf.mxu0
    %v162 = vadd.f32 %v114, %v161
    %163 = vmatmul.f32.gmra.mxu0 %v136
    %v164 = vpop.f32.mrf.mxu0
    %v165 = vadd.f32 %v119, %v164
    %166 = vmatmul.f32.gmra.mxu0 %v139
    %v167 = vpop.f32.mrf.mxu0
    %v168 = vadd.f32 %v124, %v167
    %169 = vmatmul.f32.gmra.mxu0 %v142
    %v170 = vpop.f32.mrf.mxu0
    %v171 = vadd.f32 %v129, %v170
    %172 = vdwg.mxu0
    %v173 = vtanh.pop %v162
    %v174 = vtanh.pop %v165
    %v175 = vtanh.pop %v168
    %v176 = vtanh.pop %v171
    %v177 = vadd.f32 %v99, %v173
    %v178 = vadd.f32 %v100, %v174
    %v179 = vadd.f32 %v101, %v175
    %v180 = vadd.f32 %v102, %v176
    %v181 = vld [vmem:[%s5] sm:$0xf]
    %v182 = vld [vmem:[%s6] sm:$0xf]
    %184 = vset.pattern.permute.xlu0 0
    %185 = vperm.xlu0 %184, %v182
    %v186 = vpop.permute.xlu0 %185
    %v189 = vsel %vm131, %v181, 0
    %191 = vmatpush.msra.mxu0 0.0
    %192 = vmatpush.msra.mxu0 0.0
    %193 = vmatpush.msra.mxu0 0.0
    %194 = vmatpush.msra.mxu0 0.0
    %195 = vmatpush.msra.mxu0 0.0
    %196 = vmatpush.msra.mxu0 0.0
    %197 = vmatpush.msra.mxu0 0.0
    %198 = vmatpush.msra.mxu0 0.0
    %199 = vmatpush.msra.mxu0 0.0
    %200 = vmatpush.msra.mxu0 0.0
    %201 = vmatpush.msra.mxu0 0.0
    %202 = vmatpush.msra.mxu0 0.0
    %203 = vmatpush.msra.mxu0 %v180
    %204 = vmatpush.msra.mxu0 %v179
    %205 = vmatpush.msra.mxu0 %v178
    %206 = vmatpush.msra.mxu0 %v177
    %207 = vmatmul.f32.gmra.mxu0 %v189
    %v208 = vpop.f32.mrf.mxu0
    %v209 = vadd.f32 %v186, %v208
    %210 = vdwg.mxu0
    %211 = vst [vmem:[#allocation2] sm:$0xf] %v209
    // Predicated region
    $region30: #{tpu_custom_call.1} parent=1 // pred_check
      _
    $region31: #{tpu_custom_call.1} parent=1 // pred_check_branch
      %213 = sbr.rel (0) target = $region33
    $region32: #{tpu_custom_call.1} parent=1 // pred_region
      %215 = vsyncadd [#allocation3], 0
      %s217 = sshll.u32 [#allocation2], 4
      %s218 = int_to_ptr.vmem [resolvable:$true] %s217
      %s219 = sshll.u32 %s7, 4
      %s220 = int_to_ptr.hbm [resolvable:$true] %s219
      %222 = dma.vmem_to_hbm [thread:$0]  %s218, 64, %s220, [#allocation3]
    $region33: #{tpu_custom_call.1} parent=1 // pred_fallthru
      _
    // Predicated region
    $region34: #{tpu_custom_call.1} parent=1 // pred_check
      _
    $region35: #{tpu_custom_call.1} parent=1 // pred_check_branch
      %224 = sbr.rel (0) target = $region37
    $region36: #{tpu_custom_call.1} parent=1 // pred_region
      %226 = dma.done [#allocation3], 64
    $region37: #{tpu_custom_call.1} parent=1 // pred_fallthru
      _
    %227 = vsyncpa [#allocation3], 1

</llo_original>
